<compile_context>
chip_gen: v7x
topology: tpu7x:2x2x1
jax: 0.10.0
libtpu: 0.0.40
codegen_flags: <defaults>
</compile_context>

<pallas_src>
import functools

import jax
import jax.numpy as jnp
from jax.experimental import pallas as pl
from jax.experimental.pallas import tpu as pltpu


# ------------------------------- kernels ------------------------------------


def _dcn_lowrank_kernel(d_ref, s_ref, vt_ref, wt_ref, b_ref, o_ref, *,
                        num_layers, pad_n):
    """Low-rank CrossNet on one batch tile.

    d_ref : (TB, D)        dense tile
    s_ref : (TB, F*D)      flattened sparse tile
    vt_ref: (L, Np, Rp)    V_l^T stacked over layers (MXU dtype, zero-padded)
    wt_ref: (L, Rp, Np)    W_l^T stacked over layers (MXU dtype, zero-padded)
    b_ref : (L, 1, Np)     bias per layer (f32, zero-padded)
    o_ref : (TB, Np)       output tile
    """
    tb = d_ref.shape[0]
    parts = [d_ref[...].astype(jnp.float32), s_ref[...].astype(jnp.float32)]
    if pad_n:
        parts.append(jnp.zeros((tb, pad_n), jnp.float32))
    x0 = jnp.concatenate(parts, axis=-1)          # (TB, Np) assembled in VMEM
    mm_dtype = vt_ref.dtype                       # bf16 by default; MXU-only cast
    x0_mm = x0 if mm_dtype == x0.dtype else x0.astype(mm_dtype)
    xl = x0
    for l in range(num_layers):                   # static unroll over DCN layers
        lhs = x0_mm if l == 0 else (xl if mm_dtype == xl.dtype else xl.astype(mm_dtype))
        xv = jnp.dot(lhs, vt_ref[l], preferred_element_type=jnp.float32)   # (TB, Rp)
        xv = xv if mm_dtype == xv.dtype else xv.astype(mm_dtype)
        xw = jnp.dot(xv, wt_ref[l], preferred_element_type=jnp.float32)    # (TB, Np)
        xl = x0 * (xw + b_ref[l]) + xl                                     # f32 VPU path
    o_ref[...] = xl.astype(o_ref.dtype)


def _dcn_fused_kernel(d_ref, s_ref, m_ref, b_ref, o_ref, *, num_layers, pad_n):
    """CrossNet with the per-layer fused matrix M_l = V_l^T @ W_l^T (small-N path).

    Note: M is computed in f32 in the wrapper and cast to the MXU dtype, i.e. the
    *product* is rounded rather than the factors; slightly different rounding than
    the low-rank path (tolerance-tested below).
    """
    tb = d_ref.shape[0]
    parts = [d_ref[...].astype(jnp.float32), s_ref[...].astype(jnp.float32)]
    if pad_n:
        parts.append(jnp.zeros((tb, pad_n), jnp.float32))
    x0 = jnp.concatenate(parts, axis=-1)
    mm_dtype = m_ref.dtype
    x0_mm = x0 if mm_dtype == x0.dtype else x0.astype(mm_dtype)
    xl = x0
    for l in range(num_layers):
        lhs = x0_mm if l == 0 else (xl if mm_dtype == xl.dtype else xl.astype(mm_dtype))
        xw = jnp.dot(lhs, m_ref[l], preferred_element_type=jnp.float32)    # (TB, Np)
        xl = x0 * (xw + b_ref[l]) + xl
    o_ref[...] = xl.astype(o_ref.dtype)


# ------------------------------- wrapper -------------------------------------


def _round_up(x, m):
    return ((x + m - 1) // m) * m


# (vmem_budget, vmem_limit_cap, mxu_granule, tile_b_cap, tensorcores_per_chip)
_GEN_CONFIG = {
    "v5e": (96 << 20, 100 << 20, 128, 512, 1),
    "v6e": (96 << 20, 100 << 20, 256, 512, 1),
    "v7x": (40 << 20, 52 << 20, 256, 256, 2),
    "unknown": (40 << 20, 52 << 20, 256, 256, 1),
}


def _detect_generation():
    try:
        kind = jax.devices()[0].device_kind.lower()
    except Exception:
        return "unknown"
    if "v5 lite" in kind or "v5e" in kind or "v5lite" in kind:
        return "v5e"
    if "v6" in kind:
        return "v6e"
    if "v7" in kind or "tpu7" in kind:
        return "v7x"
    return "unknown"


def interaction_dcn_arch(
    dense_features,
    sparse_features,
    params,
    *,
    tile_b=None,
    matmul_dtype=jnp.bfloat16,
    fuse_low_rank=None,
    vmem_budget_bytes=None,
):
    """Pallas implementation of InteractionDCNArch.forward.

    dense_features : (B, D)
    sparse_features: (B, F, D)
    params: dict with 'W' (L, N, R), 'V' (L, R, N), 'bias' (L, N);  N = (F+1)*D
    matmul_dtype: dtype for MXU operands (default bf16; accumulation and the
                  residual/elementwise path stay f32). Pass jnp.float32 for exact.
    returns (B, N)
    """
    B, D = dense_features.shape
    F = sparse_features.shape[1]
    # Matches the PyTorch module exactly: no sparse features -> crossnet skipped.
    if F <= 0:
        return dense_features

    W = params["W"]        # (L, N, R)
    V = params["V"]        # (L, R, N)
    bias = params["bias"]  # (L, N)
    L, N, R = W.shape
    assert N == (F + 1) * D, "crossnet in_features must equal (F+1)*D"

    gen = _detect_generation()
    budget, vmem_cap, mxu, tile_cap, ncores = _GEN_CONFIG[gen]
    if vmem_budget_bytes is not None:
        budget = int(vmem_budget_bytes)

    sparse_flat = sparse_features.reshape(B, F * D)
    in_itemsize = dense_features.dtype.itemsize
    out_dtype = dense_features.dtype
    mm_dtype = jnp.dtype(matmul_dtype) if matmul_dtype is not None else jnp.dtype(W.dtype)

    # Lane-density padding of the feature dims (weights only; the activation padding
    # is synthesized in-kernel as zeros, no extra HBM traffic).
    N_pad = _round_up(N, 128)
    pad_n = N_pad - N
    R_pad = _round_up(R, 128)

    # Pre-transpose + zero-pad once in the wrapper (tiny, one-time).
    Vt = jnp.transpose(V, (0, 2, 1)).astype(jnp.float32)               # (L, N, R)
    Wt = jnp.transpose(W, (0, 2, 1)).astype(jnp.float32)               # (L, R, N)
    Vt = jnp.pad(Vt, ((0, 0), (0, pad_n), (0, R_pad - R)))             # (L, Np, Rp)
    Wt = jnp.pad(Wt, ((0, 0), (0, R_pad - R), (0, pad_n)))             # (L, Rp, Np)
    b3 = jnp.pad(bias.astype(jnp.float32), ((0, 0), (0, pad_n)))[:, None, :]  # (L,1,Np)

    lowrank_wbytes = 2 * L * N_pad * R_pad * mm_dtype.itemsize + L * N_pad * 4
    fused_wbytes = L * N_pad * N_pad * mm_dtype.itemsize + L * N_pad * 4

    def _act_vmem(tb, fused):
        # double-buffered streamed in/out tiles
        io = 2 * tb * (D + F * D) * in_itemsize + 2 * tb * N_pad * out_dtype.itemsize
        # f32 temporaries: x0, xl, xw
        f32_tmp = 3 * tb * N_pad * 4
        # MXU-dtype copies: x0_mm + per-layer cast of xl
        mm_tmp = 2 * tb * N_pad * mm_dtype.itemsize
        if not fused:
            mm_tmp += tb * R_pad * (4 + mm_dtype.itemsize)   # xv f32 + cast
        return io + f32_tmp + mm_tmp

    if fuse_low_rank is None:
        # MXU-granule aware: on v6e/v7x (2x256x256 MXU) the low-rank two-matmul form
        # only wins when N spans more 256-wide passes than 2x the rank does.  Guard
        # with VMEM so a big fused (L,Np,Np) matrix never blows the budget (v7x).
        fuse_low_rank = (
            pl.cdiv(N_pad, mxu) <= 2 * pl.cdiv(R_pad, mxu)
            and fused_wbytes + _act_vmem(64, True) <= budget
        )

    if fuse_low_rank:
        M = jnp.einsum("lnr,lrm->lnm", Vt, Wt).astype(mm_dtype)        # (L, Np, Np)
        weight_args = (M,)
        weight_block_shapes = [(L, N_pad, N_pad)]
        weight_bytes = fused_wbytes
        matmul_flops_per_row = 2 * L * N_pad * N_pad
        kernel = functools.partial(_dcn_fused_kernel, num_layers=L, pad_n=pad_n)
    else:
        weight_args = (Vt.astype(mm_dtype), Wt.astype(mm_dtype))
        weight_block_shapes = [(L, N_pad, R_pad), (L, R_pad, N_pad)]
        weight_bytes = lowrank_wbytes
        matmul_flops_per_row = 4 * L * N_pad * R_pad
        kernel = functools.partial(_dcn_lowrank_kernel, num_layers=L, pad_n=pad_n)

    # ---- batch tiling: big tiles amortize the ~0.35us/step pipeline overhead ----
    if tile_b is None:
        tile_b = min(tile_cap, _round_up(B, 8))
    tile_b = max(8, _round_up(int(tile_b), 8))
    while tile_b > 8 and _act_vmem(tile_b, fuse_low_rank) + weight_bytes > budget:
        tile_b = max(8, _round_up(tile_b // 2, 8))
    # v7x has 2 TensorCores per chip: make sure the batch grid has >= 2 steps.
    while ncores > 1 and tile_b > 8 and pl.cdiv(B, tile_b) < ncores:
        tile_b = max(8, _round_up(tile_b // 2, 8))

    # Ragged B: partial (masked) last block instead of a wrapper-side jnp.pad,
    # avoiding an extra HBM read+write of all activations.  The computation is
    # row-independent, so garbage rows in the partial input block never affect
    # valid output rows (their stores are masked).
    grid = (pl.cdiv(B, tile_b),)

    cost = pl.CostEstimate(
        flops=int(B * (matmul_flops_per_row + 3 * L * N_pad)),
        transcendentals=0,
        bytes_accessed=int(
            dense_features.size * in_itemsize
            + sparse_flat.size * in_itemsize
            + B * N_pad * out_dtype.itemsize
            + weight_bytes
        ),
    )

    vmem_limit = int(
        min(vmem_cap,
            max(32 << 20,
                int(1.25 * (_act_vmem(tile_b, fuse_low_rank) + weight_bytes))))
    )

    def _build_in_specs(weight_mode):
        if weight_mode is not None:
            wspecs = [pl.BlockSpec(bs, lambda i: (0, 0, 0), pipeline_mode=weight_mode)
                      for bs in weight_block_shapes]
            bspec = pl.BlockSpec((L, 1, N_pad), lambda i: (0, 0, 0),
                                 pipeline_mode=weight_mode)
        else:
            wspecs = [pl.BlockSpec(bs, lambda i: (0, 0, 0))
                      for bs in weight_block_shapes]
            bspec = pl.BlockSpec((L, 1, N_pad), lambda i: (0, 0, 0))
        return [
            pl.BlockSpec((tile_b, D), lambda i: (i, 0)),       # dense tile
            pl.BlockSpec((tile_b, F * D), lambda i: (i, 0)),   # flattened sparse tile
            *wspecs,                                           # resident weights
            bspec,                                             # resident bias
        ]

    def _call(weight_mode):
        return pl.pallas_call(
            kernel,
            out_shape=jax.ShapeDtypeStruct((B, N_pad), out_dtype),
            grid_spec=pltpu.PrefetchScalarGridSpec(
                num_scalar_prefetch=0,
                grid=grid,
                in_specs=_build_in_specs(weight_mode),
                out_specs=pl.BlockSpec((tile_b, N_pad), lambda i: (i, 0)),
            ),
            compiler_params=pltpu.CompilerParams(
                dimension_semantics=("parallel",),   # megacore-shard the batch axis
                vmem_limit_bytes=vmem_limit,
            ),
            cost_estimate=cost,
        )(dense_features, sparse_flat, *weight_args, b3)

    try:
        # Grid-invariant weights: single-buffer them to halve their VMEM footprint.
        out = _call(pl.Buffered(1))
    except Exception:
        # Fallback: default pipelining (constant index_map still avoids re-DMA).
        out = _call(None)

    return out[:, :N] if pad_n else out


# --------------------------- reference / init --------------------------------


def _reference(dense_features, sparse_features, params):
    """Pure-JAX reference of the same forward pass (f32)."""
    B = dense_features.shape[0]
    x0 = jnp.concatenate(
        (dense_features[:, None, :], sparse_features), axis=1
    ).reshape(B, -1)
    xl = x0
    W, V, bias = params["W"], params["V"], params["bias"]
    for l in range(W.shape[0]):
        xv = xl @ V[l].T
        xw = xv @ W[l].T
        xl = x0 * (xw + bias[l][None, :]) + xl
    return xl


def init_params(key, in_features, num_layers, low_rank, dtype=jnp.float32):
    """Deterministic init matching LowRankCrossNet.__init__ shapes."""
    kw, kv, kb = jax.random.split(key, 3)
    std_w = (2.0 / (in_features + low_rank)) ** 0.5
    std_v = (2.0 / (low_rank + in_features)) ** 0.5
    W = std_w * jax.random.normal(kw, (num_layers, in_features, low_rank), dtype)
    V = std_v * jax.random.normal(kv, (num_layers, low_rank, in_features), dtype)
    bias = 0.01 * jax.random.normal(kb, (num_layers, in_features), dtype)
    return {"W": W, "V": V, "bias": bias}


# ------------------------------- demo / test ----------------------------------


if __name__ == "__main__":
    key = jax.random.PRNGKey(0)

    # Case 1: B=20 (ragged on purpose), D=16, F=7 -> N = (F+1)*D = 128 (lane-aligned).
    B, D, F = 20, 16, 7
    num_layers, low_rank = 3, 8
    N = (F + 1) * D

    k_d, k_s, k_p, key = jax.random.split(key, 4)
    dense = jax.random.uniform(k_d, (B, D), jnp.float32)
    sparse = jax.random.uniform(k_s, (B, F, D), jnp.float32)
    params = init_params(k_p, N, num_layers, low_rank)
    ref = _reference(dense, sparse, params)

    # (a) default config: bf16 MXU operands, auto fuse/tile, partial last block.
    out = jax.block_until_ready(interaction_dcn_arch(dense, sparse, params))
    assert out.shape == (B, N)
    err = float(jnp.max(jnp.abs(out - ref)))
    assert jnp.allclose(out, ref, atol=5e-2, rtol=5e-2), err

    # (b) exact f32 MXU, forced low-rank two-matmul path, small tile -> multi-step
    #     grid with a masked partial last block.
    out2 = jax.block_until_ready(
        interaction_dcn_arch(dense, sparse, params, tile_b=8,
                             matmul_dtype=jnp.float32, fuse_low_rank=False)
    )
    err2 = float(jnp.max(jnp.abs(out2 - ref)))
    assert jnp.allclose(out2, ref, atol=1e-4, rtol=1e-4), err2

    # (c) exact f32 MXU, forced fused (N,N) path.
    out3 = jax.block_until_ready(
        interaction_dcn_arch(dense, sparse, params,
                             matmul_dtype=jnp.float32, fuse_low_rank=True)
    )
    err3 = float(jnp.max(jnp.abs(out3 - ref)))
    assert jnp.allclose(out3, ref, atol=1e-4, rtol=1e-4), err3

    # Case 2: N not a multiple of 128 (D=16, F=5 -> N=96) exercises the N/R
    #         zero-padding path (lane-dense output, sliced in the wrapper).
    B2, D2, F2 = 12, 16, 5
    N2 = (F2 + 1) * D2
    k_d, k_s, k_p, key = jax.random.split(key, 4)
    dense2 = jax.random.uniform(k_d, (B2, D2), jnp.float32)
    sparse2 = jax.random.uniform(k_s, (B2, F2, D2), jnp.float32)
    params2 = init_params(k_p, N2, 2, 4)
    ref2 = _reference(dense2, sparse2, params2)
    out4 = jax.block_until_ready(
        interaction_dcn_arch(dense2, sparse2, params2, matmul_dtype=jnp.float32)
    )
    assert out4.shape == (B2, N2)
    err4 = float(jnp.max(jnp.abs(out4 - ref2)))
    assert jnp.allclose(out4, ref2, atol=1e-4, rtol=1e-4), err4

    # Case 3: F == 0 early-return path (module returns dense unchanged).
    out5 = interaction_dcn_arch(dense, jnp.zeros((B, 0, D), jnp.float32), params)
    assert out5.shape == (B, D)

    print("KERNEL_OK")
</pallas_src>

<mosaic_0001>
module attributes {stable_mosaic.version = 11 : i64} {
  func.func @_dcn_fused_kernel(%arg0: i32, %arg1: memref<24x16xf32, #tpu.memory_space<vmem>>, %arg2: memref<24x112xf32, #tpu.memory_space<vmem>>, %arg3: memref<3x128x128xbf16, #tpu.memory_space<vmem>>, %arg4: memref<3x1x128xf32, #tpu.memory_space<vmem>>, %arg5: memref<24x128xf32, #tpu.memory_space<vmem>>) attributes {dimension_semantics = [#tpu.dimension_semantics<parallel>], iteration_bounds = array<i64: 1>, scalar_prefetch = 0 : i64, scratch_operands = 0 : i64, tpu.core_type = #tpu.core_type<tc>, window_params = [{transform_indices = @transform_0, window_bounds = array<i64: 24, 16>}, {transform_indices = @transform_1, window_bounds = array<i64: 24, 112>}, {pipeline_mode = #tpu.pipeline_mode<synchronous>, transform_indices = @transform_2, window_bounds = array<i64: 3, 128, 128>}, {pipeline_mode = #tpu.pipeline_mode<synchronous>, transform_indices = @transform_3, window_bounds = array<i64: 3, 1, 128>}, {transform_indices = @transform_4, window_bounds = array<i64: 24, 128>}]} {
    %c0 = arith.constant 0 : index
    %c0_0 = arith.constant 0 : index
    %0 = vector.load %arg1[%c0, %c0_0] : memref<24x16xf32, #tpu.memory_space<vmem>>, vector<24x16xf32>
    %c0_1 = arith.constant 0 : index
    %c0_2 = arith.constant 0 : index
    %1 = vector.load %arg2[%c0_1, %c0_2] : memref<24x112xf32, #tpu.memory_space<vmem>>, vector<24x112xf32>
    %2 = tpu.concatenate %0, %1 in 1 : vector<24x16xf32>, vector<24x112xf32> -> vector<24x128xf32>
    %3 = arith.truncf %2 : vector<24x128xf32> to vector<24x128xbf16>
    %c0_3 = arith.constant 0 : index
    %c0_4 = arith.constant 0 : index
    %c0_5 = arith.constant 0 : index
    %4 = vector.load %arg3[%c0_3, %c0_4, %c0_5] : memref<3x128x128xbf16, #tpu.memory_space<vmem>>, vector<1x128x128xbf16>
    %5 = vector.shape_cast %4 : vector<1x128x128xbf16> to vector<128x128xbf16>
    %cst = arith.constant dense<0.000000e+00> : vector<24x128xf32>
    %6 = tpu.matmul %3, %5, %cst {dimension_numbers = #tpu.dot_dimension_numbers<[1], [0], [0], [1], [0, 0, 1, 1], [], []>} : vector<24x128xbf16>, vector<128x128xbf16>, vector<24x128xf32> -> vector<24x128xf32>
    %c0_6 = arith.constant 0 : index
    %c0_7 = arith.constant 0 : index
    %c0_8 = arith.constant 0 : index
    %7 = vector.load %arg4[%c0_6, %c0_7, %c0_8] : memref<3x1x128xf32, #tpu.memory_space<vmem>>, vector<1x1x128xf32>
    %8 = vector.shape_cast %7 : vector<1x1x128xf32> to vector<1x128xf32>
    %9 = vector.broadcast %8 : vector<1x128xf32> to vector<24x128xf32>
    %10 = arith.addf %6, %9 : vector<24x128xf32>
    %11 = arith.mulf %2, %10 : vector<24x128xf32>
    %12 = arith.addf %11, %2 : vector<24x128xf32>
    %13 = arith.truncf %12 : vector<24x128xf32> to vector<24x128xbf16>
    %c1 = arith.constant 1 : index
    %c0_9 = arith.constant 0 : index
    %c0_10 = arith.constant 0 : index
    %14 = vector.load %arg3[%c1, %c0_9, %c0_10] : memref<3x128x128xbf16, #tpu.memory_space<vmem>>, vector<1x128x128xbf16>
    %15 = vector.shape_cast %14 : vector<1x128x128xbf16> to vector<128x128xbf16>
    %cst_11 = arith.constant dense<0.000000e+00> : vector<24x128xf32>
    %16 = tpu.matmul %13, %15, %cst_11 {dimension_numbers = #tpu.dot_dimension_numbers<[1], [0], [0], [1], [0, 0, 1, 1], [], []>} : vector<24x128xbf16>, vector<128x128xbf16>, vector<24x128xf32> -> vector<24x128xf32>
    %c1_12 = arith.constant 1 : index
    %c0_13 = arith.constant 0 : index
    %c0_14 = arith.constant 0 : index
    %17 = vector.load %arg4[%c1_12, %c0_13, %c0_14] : memref<3x1x128xf32, #tpu.memory_space<vmem>>, vector<1x1x128xf32>
    %18 = vector.shape_cast %17 : vector<1x1x128xf32> to vector<1x128xf32>
    %19 = vector.broadcast %18 : vector<1x128xf32> to vector<24x128xf32>
    %20 = arith.addf %16, %19 : vector<24x128xf32>
    %21 = arith.mulf %2, %20 : vector<24x128xf32>
    %22 = arith.addf %21, %12 : vector<24x128xf32>
    %23 = arith.truncf %22 : vector<24x128xf32> to vector<24x128xbf16>
    %c2 = arith.constant 2 : index
    %c0_15 = arith.constant 0 : index
    %c0_16 = arith.constant 0 : index
    %24 = vector.load %arg3[%c2, %c0_15, %c0_16] : memref<3x128x128xbf16, #tpu.memory_space<vmem>>, vector<1x128x128xbf16>
    %25 = vector.shape_cast %24 : vector<1x128x128xbf16> to vector<128x128xbf16>
    %cst_17 = arith.constant dense<0.000000e+00> : vector<24x128xf32>
    %26 = tpu.matmul %23, %25, %cst_17 {dimension_numbers = #tpu.dot_dimension_numbers<[1], [0], [0], [1], [0, 0, 1, 1], [], []>} : vector<24x128xbf16>, vector<128x128xbf16>, vector<24x128xf32> -> vector<24x128xf32>
    %c2_18 = arith.constant 2 : index
    %c0_19 = arith.constant 0 : index
    %c0_20 = arith.constant 0 : index
    %27 = vector.load %arg4[%c2_18, %c0_19, %c0_20] : memref<3x1x128xf32, #tpu.memory_space<vmem>>, vector<1x1x128xf32>
    %28 = vector.shape_cast %27 : vector<1x1x128xf32> to vector<1x128xf32>
    %29 = vector.broadcast %28 : vector<1x128xf32> to vector<24x128xf32>
    %30 = arith.addf %26, %29 : vector<24x128xf32>
    %31 = arith.mulf %2, %30 : vector<24x128xf32>
    %32 = arith.addf %31, %22 : vector<24x128xf32>
    %c0_21 = arith.constant 0 : index
    %c0_22 = arith.constant 0 : index
    %33 = vector.load %arg5[%c0_21, %c0_22] : memref<24x128xf32, #tpu.memory_space<vmem>>, vector<24x128xf32>
    tpu.vector_store %arg5[%c0_21, %c0_22], %32 {strides = array<i32>} : memref<24x128xf32, #tpu.memory_space<vmem>>, vector<24x128xf32>,
    return
  }
  func.func @transform_0(%arg0: i32) -> (i32, i32) {
    %c0_i32 = arith.constant 0 : i32
    %c0_i32_0 = arith.constant 0 : i32
    return %arg0, %c0_i32 : i32, i32
  }
  func.func @transform_1(%arg0: i32) -> (i32, i32) {
    %c0_i32 = arith.constant 0 : i32
    %c0_i32_0 = arith.constant 0 : i32
    return %arg0, %c0_i32 : i32, i32
  }
  func.func @transform_2(%arg0: i32) -> (i32, i32, i32) {
    %c0_i32 = arith.constant 0 : i32
    %c0_i32_0 = arith.constant 0 : i32
    %c0_i32_1 = arith.constant 0 : i32
    %c0_i32_2 = arith.constant 0 : i32
    return %c0_i32, %c0_i32_0, %c0_i32_1 : i32, i32, i32
  }
  func.func @transform_3(%arg0: i32) -> (i32, i32, i32) {
    %c0_i32 = arith.constant 0 : i32
    %c0_i32_0 = arith.constant 0 : i32
    %c0_i32_1 = arith.constant 0 : i32
    %c0_i32_2 = arith.constant 0 : i32
    return %c0_i32, %c0_i32_0, %c0_i32_1 : i32, i32, i32
  }
  func.func @transform_4(%arg0: i32) -> (i32, i32) {
    %c0_i32 = arith.constant 0 : i32
    %c0_i32_0 = arith.constant 0 : i32
    return %arg0, %c0_i32 : i32, i32
  }
}

module attributes {stable_mosaic.version = 11 : i64} {
  func.func @_dcn_fused_kernel(%arg0: i32, %arg1: memref<24x16xf32, #tpu.memory_space<vmem>>, %arg2: memref<24x112xf32, #tpu.memory_space<vmem>>, %arg3: memref<3x128x128xbf16, #tpu.memory_space<vmem>>, %arg4: memref<3x1x128xf32, #tpu.memory_space<vmem>>, %arg5: memref<24x128xf32, #tpu.memory_space<vmem>>) attributes {dimension_semantics = [#tpu.dimension_semantics<parallel>], iteration_bounds = array<i64: 1>, scalar_prefetch = 0 : i64, scratch_operands = 0 : i64, tpu.core_type = #tpu.core_type<tc>, window_params = [{transform_indices = @transform_0, window_bounds = array<i64: 24, 16>}, {transform_indices = @transform_1, window_bounds = array<i64: 24, 112>}, {pipeline_mode = #tpu.pipeline_mode<synchronous>, transform_indices = @transform_2, window_bounds = array<i64: 3, 128, 128>}, {pipeline_mode = #tpu.pipeline_mode<synchronous>, transform_indices = @transform_3, window_bounds = array<i64: 3, 1, 128>}, {transform_indices = @transform_4, window_bounds = array<i64: 24, 128>}]} {
    %c0 = arith.constant 0 : index
    %c0_0 = arith.constant 0 : index
    %0 = vector.load %arg1[%c0, %c0_0] : memref<24x16xf32, #tpu.memory_space<vmem>>, vector<24x16xf32>
    %c0_1 = arith.constant 0 : index
    %c0_2 = arith.constant 0 : index
    %1 = vector.load %arg2[%c0_1, %c0_2] : memref<24x112xf32, #tpu.memory_space<vmem>>, vector<24x112xf32>
    %2 = tpu.concatenate %0, %1 in 1 : vector<24x16xf32>, vector<24x112xf32> -> vector<24x128xf32>
    %3 = arith.truncf %2 : vector<24x128xf32> to vector<24x128xbf16>
    %c0_3 = arith.constant 0 : index
    %c0_4 = arith.constant 0 : index
    %c0_5 = arith.constant 0 : index
    %4 = vector.load %arg3[%c0_3, %c0_4, %c0_5] : memref<3x128x128xbf16, #tpu.memory_space<vmem>>, vector<1x128x128xbf16>
    %5 = vector.shape_cast %4 : vector<1x128x128xbf16> to vector<128x128xbf16>
    %cst = arith.constant dense<0.000000e+00> : vector<24x128xf32>
    %6 = tpu.matmul %3, %5, %cst {dimension_numbers = #tpu.dot_dimension_numbers<[1], [0], [0], [1], [0, 0, 1, 1], [], []>} : vector<24x128xbf16>, vector<128x128xbf16>, vector<24x128xf32> -> vector<24x128xf32>
    %c0_6 = arith.constant 0 : index
    %c0_7 = arith.constant 0 : index
    %c0_8 = arith.constant 0 : index
    %7 = vector.load %arg4[%c0_6, %c0_7, %c0_8] : memref<3x1x128xf32, #tpu.memory_space<vmem>>, vector<1x1x128xf32>
    %8 = vector.shape_cast %7 : vector<1x1x128xf32> to vector<1x128xf32>
    %9 = vector.broadcast %8 : vector<1x128xf32> to vector<24x128xf32>
    %10 = arith.addf %6, %9 : vector<24x128xf32>
    %11 = arith.mulf %2, %10 : vector<24x128xf32>
    %12 = arith.addf %11, %2 : vector<24x128xf32>
    %13 = arith.truncf %12 : vector<24x128xf32> to vector<24x128xbf16>
    %c1 = arith.constant 1 : index
    %c0_9 = arith.constant 0 : index
    %c0_10 = arith.constant 0 : index
    %14 = vector.load %arg3[%c1, %c0_9, %c0_10] : memref<3x128x128xbf16, #tpu.memory_space<vmem>>, vector<1x128x128xbf16>
    %15 = vector.shape_cast %14 : vector<1x128x128xbf16> to vector<128x128xbf16>
    %cst_11 = arith.constant dense<0.000000e+00> : vector<24x128xf32>
    %16 = tpu.matmul %13, %15, %cst_11 {dimension_numbers = #tpu.dot_dimension_numbers<[1], [0], [0], [1], [0, 0, 1, 1], [], []>} : vector<24x128xbf16>, vector<128x128xbf16>, vector<24x128xf32> -> vector<24x128xf32>
    %c1_12 = arith.constant 1 : index
    %c0_13 = arith.constant 0 : index
    %c0_14 = arith.constant 0 : index
    %17 = vector.load %arg4[%c1_12, %c0_13, %c0_14] : memref<3x1x128xf32, #tpu.memory_space<vmem>>, vector<1x1x128xf32>
    %18 = vector.shape_cast %17 : vector<1x1x128xf32> to vector<1x128xf32>
    %19 = vector.broadcast %18 : vector<1x128xf32> to vector<24x128xf32>
    %20 = arith.addf %16, %19 : vector<24x128xf32>
    %21 = arith.mulf %2, %20 : vector<24x128xf32>
    %22 = arith.addf %21, %12 : vector<24x128xf32>
    %23 = arith.truncf %22 : vector<24x128xf32> to vector<24x128xbf16>
    %c2 = arith.constant 2 : index
    %c0_15 = arith.constant 0 : index
    %c0_16 = arith.constant 0 : index
    %24 = vector.load %arg3[%c2, %c0_15, %c0_16] : memref<3x128x128xbf16, #tpu.memory_space<vmem>>, vector<1x128x128xbf16>
    %25 = vector.shape_cast %24 : vector<1x128x128xbf16> to vector<128x128xbf16>
    %cst_17 = arith.constant dense<0.000000e+00> : vector<24x128xf32>
    %26 = tpu.matmul %23, %25, %cst_17 {dimension_numbers = #tpu.dot_dimension_numbers<[1], [0], [0], [1], [0, 0, 1, 1], [], []>} : vector<24x128xbf16>, vector<128x128xbf16>, vector<24x128xf32> -> vector<24x128xf32>
    %c2_18 = arith.constant 2 : index
    %c0_19 = arith.constant 0 : index
    %c0_20 = arith.constant 0 : index
    %27 = vector.load %arg4[%c2_18, %c0_19, %c0_20] : memref<3x1x128xf32, #tpu.memory_space<vmem>>, vector<1x1x128xf32>
    %28 = vector.shape_cast %27 : vector<1x1x128xf32> to vector<1x128xf32>
    %29 = vector.broadcast %28 : vector<1x128xf32> to vector<24x128xf32>
    %30 = arith.addf %26, %29 : vector<24x128xf32>
    %31 = arith.mulf %2, %30 : vector<24x128xf32>
    %32 = arith.addf %31, %22 : vector<24x128xf32>
    %c0_21 = arith.constant 0 : index
    %c0_22 = arith.constant 0 : index
    %33 = vector.load %arg5[%c0_21, %c0_22] : memref<24x128xf32, #tpu.memory_space<vmem>>, vector<24x128xf32>
    tpu.vector_store %arg5[%c0_21, %c0_22], %32 {strides = array<i32>} : memref<24x128xf32, #tpu.memory_space<vmem>>, vector<24x128xf32>,
    return
  }
  func.func @transform_0(%arg0: i32) -> (i32, i32) {
    %c0_i32 = arith.constant 0 : i32
    %c0_i32_0 = arith.constant 0 : i32
    return %arg0, %c0_i32 : i32, i32
  }
  func.func @transform_1(%arg0: i32) -> (i32, i32) {
    %c0_i32 = arith.constant 0 : i32
    %c0_i32_0 = arith.constant 0 : i32
    return %arg0, %c0_i32 : i32, i32
  }
  func.func @transform_2(%arg0: i32) -> (i32, i32, i32) {
    %c0_i32 = arith.constant 0 : i32
    %c0_i32_0 = arith.constant 0 : i32
    %c0_i32_1 = arith.constant 0 : i32
    %c0_i32_2 = arith.constant 0 : i32
    return %c0_i32, %c0_i32_0, %c0_i32_1 : i32, i32, i32
  }
  func.func @transform_3(%arg0: i32) -> (i32, i32, i32) {
    %c0_i32 = arith.constant 0 : i32
    %c0_i32_0 = arith.constant 0 : i32
    %c0_i32_1 = arith.constant 0 : i32
    %c0_i32_2 = arith.constant 0 : i32
    return %c0_i32, %c0_i32_0, %c0_i32_1 : i32, i32, i32
  }
  func.func @transform_4(%arg0: i32) -> (i32, i32) {
    %c0_i32 = arith.constant 0 : i32
    %c0_i32_0 = arith.constant 0 : i32
    return %arg0, %c0_i32 : i32, i32
  }
}

</mosaic_0001>

<llo_original>
// kernel: tpu_custom_call.1
$region0: #{tpu_custom_call.1}
  #allocation0 [shape = 'u32[]', space=smem, size = 0x4, offset = 0x4, fixed_abs, tag = 'smem constant byte address 0x4 - core index']
  #allocation1 [shape = 'u32[144,128]{1,0:T(1,128)}', space=vmem, size = 0x12000, scoped, tag = 'internal scratch']
  %s0 = inlined_call_operand.vmem [shape: f32[20,16], index: 0, kind: input, shape index: {}]
  %s1 = inlined_call_operand.vmem [shape: f32[20,112], index: 1, kind: input, shape index: {}]
  %s2 = inlined_call_operand.hbm [shape: bf16[3,128,128], index: 2, kind: input, shape index: {}]
  %s3 = inlined_call_operand.vmem [shape: f32[3,1,128], index: 3, kind: input, shape index: {}]
  %s4 = inlined_call_operand.hbm [shape: f32[20,128], index: 4, kind: output, shape index: {}]
  %s5 = sld [smem:[#allocation0]]
  $region30: #{tpu_custom_call.1} parent=0
    _
  %s7 = ssub.s32 1, %s5
  %s8 = scalar_select 0, %s7, %s5
  $region1: #{tpu_custom_call.1} parent=0
    #allocation2 [shape = 'u8[98304]{0}', space=vmem, size = 0x18000, scoped, tag = 'input window, operand 2, single buffered']
    #allocation3 [shape = 's32[1]{0}', space=sflag, size = 0x4, scoped, tag = 'scoped memory for tpu_custom_call.1']
    #allocation4 [shape = 's32[1]{0}', space=sflag, size = 0x4, scoped, tag = 'scoped memory for tpu_custom_call.1']
    #allocation5 [shape = 'u8[12288]{0}', space=vmem, size = 0x3000, scoped, tag = 'output window, operand 0, single buffered']
    %9 = vsyncpa [#allocation3], 0
    %10 = vsyncpa [#allocation4], 0
    // Predicated region
    $region2: #{tpu_custom_call.1} parent=1 // pred_check
      _
    $region3: #{tpu_custom_call.1} parent=1 // pred_check_branch
      %12 = sbr.rel (0) target = $region5
    $region4: #{tpu_custom_call.1} parent=1 // pred_region
      _
    $region5: #{tpu_custom_call.1} parent=1 // pred_fallthru
      _
    // Predicated region
    $region6: #{tpu_custom_call.1} parent=1 // pred_check
      _
    $region7: #{tpu_custom_call.1} parent=1 // pred_check_branch
      %14 = sbr.rel (0) target = $region9
    $region8: #{tpu_custom_call.1} parent=1 // pred_region
      _
    $region9: #{tpu_custom_call.1} parent=1 // pred_fallthru
      _
    // Predicated region
    $region10: #{tpu_custom_call.1} parent=1 // pred_check
      _
    $region11: #{tpu_custom_call.1} parent=1 // pred_check_branch
      %16 = sbr.rel (0) target = $region13
    $region12: #{tpu_custom_call.1} parent=1 // pred_region
      %s18 = ssub.s32 3072, 3072
      %19 = vsyncadd [#allocation3], %s18
      %s20 = sshll.u32 [#allocation2], 4
      %s21 = int_to_ptr.vmem [resolvable:$true] %s20
      %26 = dma.hbm_to_vmem [thread:$0]  %s2, 3072, %s21, [#allocation3], 64, 64, 4
    $region13: #{tpu_custom_call.1} parent=1 // pred_fallthru
      _
    // Predicated region
    $region14: #{tpu_custom_call.1} parent=1 // pred_check
      _
    $region15: #{tpu_custom_call.1} parent=1 // pred_check_branch
      %28 = sbr.rel (0) target = $region17
    $region16: #{tpu_custom_call.1} parent=1 // pred_region
      _
    $region17: #{tpu_custom_call.1} parent=1 // pred_fallthru
      _
    // Predicated region
    $region18: #{tpu_custom_call.1} parent=1 // pred_check
      _
    $region19: #{tpu_custom_call.1} parent=1 // pred_check_branch
      %30 = sbr.rel (0) target = $region21
    $region20: #{tpu_custom_call.1} parent=1 // pred_region
      %31 = dma.done [#allocation3], 3072
    $region21: #{tpu_custom_call.1} parent=1 // pred_fallthru
      _
    %v33 = vld [vmem:[%s0] sm:$0xff]
    %v34 = vld [vmem:[%s0 + $0x8] sm:$0xff]
    %v35 = vld [vmem:[%s0 + $0x10] sm:$0xff]
    %v36 = vld [vmem:[%s1] sm:$0xff]
    %v37 = vld [vmem:[%s1 + $0x8] sm:$0xff]
    %v38 = vld [vmem:[%s1 + $0x10] sm:$0xff]
    %42 = vrot.lane.b32.xlu0 %v36, 16
    %v43 = vpop.permute.xlu0 %42
    %44 = vrot.lane.b32.xlu0 %v37, 16
    %v45 = vpop.permute.xlu0 %44
    %46 = vrot.lane.b32.xlu0 %v38, 16
    %v47 = vpop.permute.xlu0 %46
    %vm51 = vcmask 130048
    %v52 = vsel %vm51, %v33, %v43
    %v53 = vsel %vm51, %v34, %v45
    %v54 = vsel %vm51, %v35, %v47
    %v55 = vpack.c.bf16 %v53, %v52
    %v56 = vpack.c.bf16 %v54, %v54
    %v57 = vld [vmem:[#allocation2] sm:$0xf]
    %v58 = vld [vmem:[#allocation2 + $0x4] sm:$0xf]
    %v59 = vld [vmem:[#allocation2 + $0x8] sm:$0xf]
    %v60 = vld [vmem:[#allocation2 + $0xc] sm:$0xf]
    %v61 = vld [vmem:[#allocation2 + $0x10] sm:$0xf]
    %v62 = vld [vmem:[#allocation2 + $0x14] sm:$0xf]
    %v63 = vld [vmem:[#allocation2 + $0x18] sm:$0xf]
    %v64 = vld [vmem:[#allocation2 + $0x1c] sm:$0xf]
    %v65 = vld [vmem:[#allocation2 + $0x20] sm:$0xf]
    %v66 = vld [vmem:[#allocation2 + $0x24] sm:$0xf]
    %v67 = vld [vmem:[#allocation2 + $0x28] sm:$0xf]
    %v68 = vld [vmem:[#allocation2 + $0x2c] sm:$0xf]
    %v69 = vld [vmem:[#allocation2 + $0x30] sm:$0xf]
    %v70 = vld [vmem:[#allocation2 + $0x34] sm:$0xf]
    %v71 = vld [vmem:[#allocation2 + $0x38] sm:$0xf]
    %v72 = vld [vmem:[#allocation2 + $0x3c] sm:$0xf]
    %v73 = vld [vmem:[%s3] sm:$0x1]
    %v75 = vlaneseq
    %v76 = vshrl.u32 %v75, 7
    %v77 = vsub.s32 0, %v76
    %v78 = vrot.slane %v73, %v77
    %v96 = vunpack.c.l.b16 %v57
    %v97 = vunpack.c.l.b16 %v58
    %v98 = vunpack.c.l.b16 %v59
    %v99 = vunpack.c.l.b16 %v60
    %v100 = vunpack.c.l.b16 %v61
    %v101 = vunpack.c.l.b16 %v62
    %v102 = vunpack.c.l.b16 %v63
    %v103 = vunpack.c.l.b16 %v64
    %v104 = vunpack.c.l.b16 %v65
    %v105 = vunpack.c.l.b16 %v66
    %v106 = vunpack.c.l.b16 %v67
    %v107 = vunpack.c.l.b16 %v68
    %v108 = vunpack.c.l.b16 %v69
    %v109 = vunpack.c.l.b16 %v70
    %v110 = vunpack.c.l.b16 %v71
    %v111 = vunpack.c.l.b16 %v72
    %v112 = vpack.c.b16 %v97, %v96
    %v113 = vpack.c.b16 %v99, %v98
    %v114 = vpack.c.b16 %v101, %v100
    %v115 = vpack.c.b16 %v103, %v102
    %v116 = vpack.c.b16 %v105, %v104
    %v117 = vpack.c.b16 %v107, %v106
    %v118 = vpack.c.b16 %v109, %v108
    %v119 = vpack.c.b16 %v111, %v110
    %128 = vmatprep.subr.bf16.mxu0 0
    %129 = vmatpush1.bf16.msra.mxu0 %v112
    %130 = vmatprep.subr.bf16.mxu0 0
    %131 = vmatpush1.bf16.msra.mxu0 %v113
    %132 = vmatprep.subr.bf16.mxu0 0
    %133 = vmatpush1.bf16.msra.mxu0 %v114
    %134 = vmatprep.subr.bf16.mxu0 0
    %135 = vmatpush1.bf16.msra.mxu0 %v115
    %136 = vmatprep.subr.bf16.mxu0 0
    %137 = vmatpush1.bf16.msra.mxu0 %v116
    %138 = vmatprep.subr.bf16.mxu0 0
    %139 = vmatpush1.bf16.msra.mxu0 %v117
    %140 = vmatprep.subr.bf16.mxu0 0
    %141 = vmatpush1.bf16.msra.mxu0 %v118
    %142 = vmatprep.subr.bf16.mxu0 0
    %143 = vmatpush1.bf16.msra.mxu0 %v119
    %144 = vmatprep.subr.bf16.mxu0 0
    %145 = vmatpush1.bf16.msra.mxu0 0
    %146 = vmatprep.subr.bf16.mxu0 0
    %147 = vmatpush1.bf16.msra.mxu0 0
    %148 = vmatprep.subr.bf16.mxu0 0
    %149 = vmatpush1.bf16.msra.mxu0 0
    %150 = vmatprep.subr.bf16.mxu0 0
    %151 = vmatpush1.bf16.msra.mxu0 0
    %152 = vmatprep.subr.bf16.mxu0 0
    %153 = vmatpush1.bf16.msra.mxu0 0
    %154 = vmatprep.subr.bf16.mxu0 0
    %155 = vmatpush1.bf16.msra.mxu0 0
    %156 = vmatprep.subr.bf16.mxu0 0
    %157 = vmatpush1.bf16.msra.mxu0 0
    %158 = vmatprep.subr.bf16.mxu0 0
    %159 = vmatpush1.bf16.msra.mxu0 0
    %160 = vmatprep.mubr.bf16.mxu0 0
    %161 = vmatmul.mubr.bf16.gmra.mrb[0].mxu0 %v55
    %v162 = vpop.f32.mrb[0].mxu0
    %v163 = vadd.f32 %v78, %v162
    %v164 = vpop.f32.mrb[0].mxu0
    %v165 = vpop.f32.mrb[0].mxu0
    %v166 = vadd.f32 %v78, %v165
    %v167 = vpop.f32.mrb[0].mxu0
    %168 = vmatprep.mubr.bf16.mxu0 0
    %169 = vmatmul.mubr.bf16.gmra.mrb[0].mxu0 %v56
    %v170 = vpop.f32.mrb[0].mxu0
    %v171 = vadd.f32 %v78, %v170
    %v172 = vpop.f32.mrb[0].mxu0
    %v173 = vpop.f32.mrb[0].mxu0
    %v174 = vpop.f32.mrb[0].mxu0
    %175 = vdwg.mxu0
    %v176 = vmul.f32 %v52, %v163
    %v177 = vmul.f32 %v53, %v166
    %v178 = vmul.f32 %v54, %v171
    %v179 = vadd.f32 %v176, %v52
    %v180 = vadd.f32 %v177, %v53
    %v181 = vadd.f32 %v178, %v54
    %v182 = vpack.c.bf16 %v180, %v179
    %v183 = vpack.c.bf16 %v181, %v181
    %s184 = scalar_lea.vmem [#allocation2], 64
    %v185 = vld [vmem:[%s184] sm:$0xf]
    %v186 = vld [vmem:[%s184 + $0x4] sm:$0xf]
    %v187 = vld [vmem:[%s184 + $0x8] sm:$0xf]
    %v188 = vld [vmem:[%s184 + $0xc] sm:$0xf]
    %v189 = vld [vmem:[%s184 + $0x10] sm:$0xf]
    %v190 = vld [vmem:[%s184 + $0x14] sm:$0xf]
    %v191 = vld [vmem:[%s184 + $0x18] sm:$0xf]
    %v192 = vld [vmem:[%s184 + $0x1c] sm:$0xf]
    %v193 = vld [vmem:[%s184 + $0x20] sm:$0xf]
    %v194 = vld [vmem:[%s184 + $0x24] sm:$0xf]
    %v195 = vld [vmem:[%s184 + $0x28] sm:$0xf]
    %v196 = vld [vmem:[%s184 + $0x2c] sm:$0xf]
    %v197 = vld [vmem:[%s184 + $0x30] sm:$0xf]
    %v198 = vld [vmem:[%s184 + $0x34] sm:$0xf]
    %v199 = vld [vmem:[%s184 + $0x38] sm:$0xf]
    %v200 = vld [vmem:[%s184 + $0x3c] sm:$0xf]
    %s201 = scalar_lea.vmem %s3, 1
    %v202 = vld [vmem:[%s201] sm:$0x1]
    %v204 = vlaneseq
    %v205 = vshrl.u32 %v204, 7
    %v206 = vsub.s32 0, %v205
    %v207 = vrot.slane %v202, %v206
    %v225 = vunpack.c.l.b16 %v185
    %v226 = vunpack.c.l.b16 %v186
    %v227 = vunpack.c.l.b16 %v187
    %v228 = vunpack.c.l.b16 %v188
    %v229 = vunpack.c.l.b16 %v189
    %v230 = vunpack.c.l.b16 %v190
    %v231 = vunpack.c.l.b16 %v191
    %v232 = vunpack.c.l.b16 %v192
    %v233 = vunpack.c.l.b16 %v193
    %v234 = vunpack.c.l.b16 %v194
    %v235 = vunpack.c.l.b16 %v195
    %v236 = vunpack.c.l.b16 %v196
    %v237 = vunpack.c.l.b16 %v197
    %v238 = vunpack.c.l.b16 %v198
    %v239 = vunpack.c.l.b16 %v199
    %v240 = vunpack.c.l.b16 %v200
    %v241 = vpack.c.b16 %v226, %v225
    %v242 = vpack.c.b16 %v228, %v227
    %v243 = vpack.c.b16 %v230, %v229
    %v244 = vpack.c.b16 %v232, %v231
    %v245 = vpack.c.b16 %v234, %v233
    %v246 = vpack.c.b16 %v236, %v235
    %v247 = vpack.c.b16 %v238, %v237
    %v248 = vpack.c.b16 %v240, %v239
    %257 = vmatprep.subr.bf16.mxu0 0
    %258 = vmatpush1.bf16.msra.mxu0 %v241
    %259 = vmatprep.subr.bf16.mxu0 0
    %260 = vmatpush1.bf16.msra.mxu0 %v242
    %261 = vmatprep.subr.bf16.mxu0 0
    %262 = vmatpush1.bf16.msra.mxu0 %v243
    %263 = vmatprep.subr.bf16.mxu0 0
    %264 = vmatpush1.bf16.msra.mxu0 %v244
    %265 = vmatprep.subr.bf16.mxu0 0
    %266 = vmatpush1.bf16.msra.mxu0 %v245
    %267 = vmatprep.subr.bf16.mxu0 0
    %268 = vmatpush1.bf16.msra.mxu0 %v246
    %269 = vmatprep.subr.bf16.mxu0 0
    %270 = vmatpush1.bf16.msra.mxu0 %v247
    %271 = vmatprep.subr.bf16.mxu0 0
    %272 = vmatpush1.bf16.msra.mxu0 %v248
    %273 = vmatprep.subr.bf16.mxu0 0
    %274 = vmatpush1.bf16.msra.mxu0 0
    %275 = vmatprep.subr.bf16.mxu0 0
    %276 = vmatpush1.bf16.msra.mxu0 0
    %277 = vmatprep.subr.bf16.mxu0 0
    %278 = vmatpush1.bf16.msra.mxu0 0
    %279 = vmatprep.subr.bf16.mxu0 0
    %280 = vmatpush1.bf16.msra.mxu0 0
    %281 = vmatprep.subr.bf16.mxu0 0
    %282 = vmatpush1.bf16.msra.mxu0 0
    %283 = vmatprep.subr.bf16.mxu0 0
    %284 = vmatpush1.bf16.msra.mxu0 0
    %285 = vmatprep.subr.bf16.mxu0 0
    %286 = vmatpush1.bf16.msra.mxu0 0
    %287 = vmatprep.subr.bf16.mxu0 0
    %288 = vmatpush1.bf16.msra.mxu0 0
    %289 = vmatprep.mubr.bf16.mxu0 0
    %290 = vmatmul.mubr.bf16.gmra.mrb[0].mxu0 %v182
    %v291 = vpop.f32.mrb[0].mxu0
    %v292 = vadd.f32 %v207, %v291
    %v293 = vpop.f32.mrb[0].mxu0
    %v294 = vpop.f32.mrb[0].mxu0
    %v295 = vadd.f32 %v207, %v294
    %v296 = vpop.f32.mrb[0].mxu0
    %297 = vmatprep.mubr.bf16.mxu0 0
    %298 = vmatmul.mubr.bf16.gmra.mrb[0].mxu0 %v183
    %v299 = vpop.f32.mrb[0].mxu0
    %v300 = vadd.f32 %v207, %v299
    %v301 = vpop.f32.mrb[0].mxu0
    %v302 = vpop.f32.mrb[0].mxu0
    %v303 = vpop.f32.mrb[0].mxu0
    %304 = vdwg.mxu0
    %v305 = vmul.f32 %v52, %v292
    %v306 = vmul.f32 %v53, %v295
    %v307 = vmul.f32 %v54, %v300
    %v308 = vadd.f32 %v305, %v179
    %v309 = vadd.f32 %v306, %v180
    %v310 = vadd.f32 %v307, %v181
    %v311 = vpack.c.bf16 %v309, %v308
    %v312 = vpack.c.bf16 %v310, %v310
    %s313 = scalar_lea.vmem [#allocation2], 128
    %v314 = vld [vmem:[%s313] sm:$0xf]
    %v315 = vld [vmem:[%s313 + $0x4] sm:$0xf]
    %v316 = vld [vmem:[%s313 + $0x8] sm:$0xf]
    %v317 = vld [vmem:[%s313 + $0xc] sm:$0xf]
    %v318 = vld [vmem:[%s313 + $0x10] sm:$0xf]
    %v319 = vld [vmem:[%s313 + $0x14] sm:$0xf]
    %v320 = vld [vmem:[%s313 + $0x18] sm:$0xf]
    %v321 = vld [vmem:[%s313 + $0x1c] sm:$0xf]
    %v322 = vld [vmem:[%s313 + $0x20] sm:$0xf]
    %v323 = vld [vmem:[%s313 + $0x24] sm:$0xf]
    %v324 = vld [vmem:[%s313 + $0x28] sm:$0xf]
    %v325 = vld [vmem:[%s313 + $0x2c] sm:$0xf]
    %v326 = vld [vmem:[%s313 + $0x30] sm:$0xf]
    %v327 = vld [vmem:[%s313 + $0x34] sm:$0xf]
    %v328 = vld [vmem:[%s313 + $0x38] sm:$0xf]
    %v329 = vld [vmem:[%s313 + $0x3c] sm:$0xf]
    %s330 = scalar_lea.vmem %s3, 2
    %v331 = vld [vmem:[%s330] sm:$0x1]
    %v333 = vlaneseq
    %v334 = vshrl.u32 %v333, 7
    %v335 = vsub.s32 0, %v334
    %v336 = vrot.slane %v331, %v335
    %v354 = vunpack.c.l.b16 %v314
    %v355 = vunpack.c.l.b16 %v315
    %v356 = vunpack.c.l.b16 %v316
    %v357 = vunpack.c.l.b16 %v317
    %v358 = vunpack.c.l.b16 %v318
    %v359 = vunpack.c.l.b16 %v319
    %v360 = vunpack.c.l.b16 %v320
    %v361 = vunpack.c.l.b16 %v321
    %v362 = vunpack.c.l.b16 %v322
    %v363 = vunpack.c.l.b16 %v323
    %v364 = vunpack.c.l.b16 %v324
    %v365 = vunpack.c.l.b16 %v325
    %v366 = vunpack.c.l.b16 %v326
    %v367 = vunpack.c.l.b16 %v327
    %v368 = vunpack.c.l.b16 %v328
    %v369 = vunpack.c.l.b16 %v329
    %v370 = vpack.c.b16 %v355, %v354
    %v371 = vpack.c.b16 %v357, %v356
    %v372 = vpack.c.b16 %v359, %v358
    %v373 = vpack.c.b16 %v361, %v360
    %v374 = vpack.c.b16 %v363, %v362
    %v375 = vpack.c.b16 %v365, %v364
    %v376 = vpack.c.b16 %v367, %v366
    %v377 = vpack.c.b16 %v369, %v368
    %386 = vmatprep.subr.bf16.mxu0 0
    %387 = vmatpush1.bf16.msra.mxu0 %v370
    %388 = vmatprep.subr.bf16.mxu0 0
    %389 = vmatpush1.bf16.msra.mxu0 %v371
    %390 = vmatprep.subr.bf16.mxu0 0
    %391 = vmatpush1.bf16.msra.mxu0 %v372
    %392 = vmatprep.subr.bf16.mxu0 0
    %393 = vmatpush1.bf16.msra.mxu0 %v373
    %394 = vmatprep.subr.bf16.mxu0 0
    %395 = vmatpush1.bf16.msra.mxu0 %v374
    %396 = vmatprep.subr.bf16.mxu0 0
    %397 = vmatpush1.bf16.msra.mxu0 %v375
    %398 = vmatprep.subr.bf16.mxu0 0
    %399 = vmatpush1.bf16.msra.mxu0 %v376
    %400 = vmatprep.subr.bf16.mxu0 0
    %401 = vmatpush1.bf16.msra.mxu0 %v377
    %402 = vmatprep.subr.bf16.mxu0 0
    %403 = vmatpush1.bf16.msra.mxu0 0
    %404 = vmatprep.subr.bf16.mxu0 0
    %405 = vmatpush1.bf16.msra.mxu0 0
    %406 = vmatprep.subr.bf16.mxu0 0
    %407 = vmatpush1.bf16.msra.mxu0 0
    %408 = vmatprep.subr.bf16.mxu0 0
    %409 = vmatpush1.bf16.msra.mxu0 0
    %410 = vmatprep.subr.bf16.mxu0 0
    %411 = vmatpush1.bf16.msra.mxu0 0
    %412 = vmatprep.subr.bf16.mxu0 0
    %413 = vmatpush1.bf16.msra.mxu0 0
    %414 = vmatprep.subr.bf16.mxu0 0
    %415 = vmatpush1.bf16.msra.mxu0 0
    %416 = vmatprep.subr.bf16.mxu0 0
    %417 = vmatpush1.bf16.msra.mxu0 0
    %418 = vmatprep.mubr.bf16.mxu0 0
    %419 = vmatmul.mubr.bf16.gmra.mrb[0].mxu0 %v311
    %v420 = vpop.f32.mrb[0].mxu0
    %v421 = vadd.f32 %v336, %v420
    %v422 = vpop.f32.mrb[0].mxu0
    %v423 = vpop.f32.mrb[0].mxu0
    %v424 = vadd.f32 %v336, %v423
    %v425 = vpop.f32.mrb[0].mxu0
    %426 = vmatprep.mubr.bf16.mxu0 0
    %427 = vmatmul.mubr.bf16.gmra.mrb[0].mxu0 %v312
    %v428 = vpop.f32.mrb[0].mxu0
    %v429 = vadd.f32 %v336, %v428
    %v430 = vpop.f32.mrb[0].mxu0
    %v431 = vpop.f32.mrb[0].mxu0
    %v432 = vpop.f32.mrb[0].mxu0
    %433 = vdwg.mxu0
    %v434 = vmul.f32 %v52, %v421
    %v435 = vmul.f32 %v53, %v424
    %v436 = vmul.f32 %v54, %v429
    %v437 = vadd.f32 %v434, %v308
    %v438 = vadd.f32 %v435, %v309
    %v439 = vadd.f32 %v436, %v310
    %440 = vst [vmem:[#allocation5] sm:$0xff] %v437
    %441 = vst [vmem:[#allocation5 + $0x8] sm:$0xff] %v438
    %442 = vst [vmem:[#allocation5 + $0x10] sm:$0xff] %v439
    // Predicated region
    $region22: #{tpu_custom_call.1} parent=1 // pred_check
      _
    $region23: #{tpu_custom_call.1} parent=1 // pred_check_branch
      %444 = sbr.rel (0) target = $region25
    $region24: #{tpu_custom_call.1} parent=1 // pred_region
      %s446 = ssub.s32 384, 384
      %447 = vsyncadd [#allocation4], %s446
      %s448 = sshll.u32 [#allocation5], 4
      %s449 = int_to_ptr.vmem [resolvable:$true] %s448
      %454 = dma.vmem_to_hbm [thread:$0]  %s449, 384, %s4, [#allocation4], 128, 128, 8
    $region25: #{tpu_custom_call.1} parent=1 // pred_fallthru
      _
    // Predicated region
    $region26: #{tpu_custom_call.1} parent=1 // pred_check
      _
    $region27: #{tpu_custom_call.1} parent=1 // pred_check_branch
      %456 = sbr.rel (0) target = $region29
    $region28: #{tpu_custom_call.1} parent=1 // pred_region
      %457 = dma.done [#allocation4], 384
    $region29: #{tpu_custom_call.1} parent=1 // pred_fallthru
      _
    %458 = vsyncpa [#allocation3], 1
    %459 = vsyncpa [#allocation4], 1

// kernel: tpu_custom_call.1
$region0: #{tpu_custom_call.1}
  #allocation0 [shape = 'u32[]', space=smem, size = 0x4, offset = 0x4, fixed_abs, tag = 'smem constant byte address 0x4 - core index']
  #allocation1 [shape = 'u32[144,128]{1,0:T(1,128)}', space=vmem, size = 0x12000, scoped, tag = 'internal scratch']
  %s0 = inlined_call_operand.vmem [shape: f32[20,16], index: 0, kind: input, shape index: {}]
  %s1 = inlined_call_operand.vmem [shape: f32[20,112], index: 1, kind: input, shape index: {}]
  %s2 = inlined_call_operand.hbm [shape: bf16[3,128,128], index: 2, kind: input, shape index: {}]
  %s3 = inlined_call_operand.vmem [shape: f32[3,1,128], index: 3, kind: input, shape index: {}]
  %s4 = inlined_call_operand.hbm [shape: f32[20,128], index: 4, kind: output, shape index: {}]
  %s5 = sld [smem:[#allocation0]]
  $region30: #{tpu_custom_call.1} parent=0
    _
  %s7 = ssub.s32 1, %s5
  %s8 = scalar_select 0, %s7, %s5
  $region1: #{tpu_custom_call.1} parent=0
    #allocation2 [shape = 'u8[98304]{0}', space=vmem, size = 0x18000, scoped, tag = 'input window, operand 2, single buffered']
    #allocation3 [shape = 's32[1]{0}', space=sflag, size = 0x4, scoped, tag = 'scoped memory for tpu_custom_call.1']
    #allocation4 [shape = 's32[1]{0}', space=sflag, size = 0x4, scoped, tag = 'scoped memory for tpu_custom_call.1']
    #allocation5 [shape = 'u8[12288]{0}', space=vmem, size = 0x3000, scoped, tag = 'output window, operand 0, single buffered']
    %9 = vsyncpa [#allocation3], 0
    %10 = vsyncpa [#allocation4], 0
    // Predicated region
    $region2: #{tpu_custom_call.1} parent=1 // pred_check
      _
    $region3: #{tpu_custom_call.1} parent=1 // pred_check_branch
      %12 = sbr.rel (0) target = $region5
    $region4: #{tpu_custom_call.1} parent=1 // pred_region
      _
    $region5: #{tpu_custom_call.1} parent=1 // pred_fallthru
      _
    // Predicated region
    $region6: #{tpu_custom_call.1} parent=1 // pred_check
      _
    $region7: #{tpu_custom_call.1} parent=1 // pred_check_branch
      %14 = sbr.rel (0) target = $region9
    $region8: #{tpu_custom_call.1} parent=1 // pred_region
      _
    $region9: #{tpu_custom_call.1} parent=1 // pred_fallthru
      _
    // Predicated region
    $region10: #{tpu_custom_call.1} parent=1 // pred_check
      _
    $region11: #{tpu_custom_call.1} parent=1 // pred_check_branch
      %16 = sbr.rel (0) target = $region13
    $region12: #{tpu_custom_call.1} parent=1 // pred_region
      %s18 = ssub.s32 3072, 3072
      %19 = vsyncadd [#allocation3], %s18
      %s20 = sshll.u32 [#allocation2], 4
      %s21 = int_to_ptr.vmem [resolvable:$true] %s20
      %26 = dma.hbm_to_vmem [thread:$0]  %s2, 3072, %s21, [#allocation3], 64, 64, 4
    $region13: #{tpu_custom_call.1} parent=1 // pred_fallthru
      _
    // Predicated region
    $region14: #{tpu_custom_call.1} parent=1 // pred_check
      _
    $region15: #{tpu_custom_call.1} parent=1 // pred_check_branch
      %28 = sbr.rel (0) target = $region17
    $region16: #{tpu_custom_call.1} parent=1 // pred_region
      _
    $region17: #{tpu_custom_call.1} parent=1 // pred_fallthru
      _
    // Predicated region
    $region18: #{tpu_custom_call.1} parent=1 // pred_check
      _
    $region19: #{tpu_custom_call.1} parent=1 // pred_check_branch
      %30 = sbr.rel (0) target = $region21
    $region20: #{tpu_custom_call.1} parent=1 // pred_region
      %31 = dma.done [#allocation3], 3072
    $region21: #{tpu_custom_call.1} parent=1 // pred_fallthru
      _
    %v33 = vld [vmem:[%s0] sm:$0xff]
    %v34 = vld [vmem:[%s0 + $0x8] sm:$0xff]
    %v35 = vld [vmem:[%s0 + $0x10] sm:$0xff]
    %v36 = vld [vmem:[%s1] sm:$0xff]
    %v37 = vld [vmem:[%s1 + $0x8] sm:$0xff]
    %v38 = vld [vmem:[%s1 + $0x10] sm:$0xff]
    %42 = vrot.lane.b32.xlu0 %v36, 16
    %v43 = vpop.permute.xlu0 %42
    %44 = vrot.lane.b32.xlu0 %v37, 16
    %v45 = vpop.permute.xlu0 %44
    %46 = vrot.lane.b32.xlu0 %v38, 16
    %v47 = vpop.permute.xlu0 %46
    %vm51 = vcmask 130048
    %v52 = vsel %vm51, %v33, %v43
    %v53 = vsel %vm51, %v34, %v45
    %v54 = vsel %vm51, %v35, %v47
    %v55 = vpack.c.bf16 %v53, %v52
    %v56 = vpack.c.bf16 %v54, %v54
    %v57 = vld [vmem:[#allocation2] sm:$0xf]
    %v58 = vld [vmem:[#allocation2 + $0x4] sm:$0xf]
    %v59 = vld [vmem:[#allocation2 + $0x8] sm:$0xf]
    %v60 = vld [vmem:[#allocation2 + $0xc] sm:$0xf]
    %v61 = vld [vmem:[#allocation2 + $0x10] sm:$0xf]
    %v62 = vld [vmem:[#allocation2 + $0x14] sm:$0xf]
    %v63 = vld [vmem:[#allocation2 + $0x18] sm:$0xf]
    %v64 = vld [vmem:[#allocation2 + $0x1c] sm:$0xf]
    %v65 = vld [vmem:[#allocation2 + $0x20] sm:$0xf]
    %v66 = vld [vmem:[#allocation2 + $0x24] sm:$0xf]
    %v67 = vld [vmem:[#allocation2 + $0x28] sm:$0xf]
    %v68 = vld [vmem:[#allocation2 + $0x2c] sm:$0xf]
    %v69 = vld [vmem:[#allocation2 + $0x30] sm:$0xf]
    %v70 = vld [vmem:[#allocation2 + $0x34] sm:$0xf]
    %v71 = vld [vmem:[#allocation2 + $0x38] sm:$0xf]
    %v72 = vld [vmem:[#allocation2 + $0x3c] sm:$0xf]
    %v73 = vld [vmem:[%s3] sm:$0x1]
    %v75 = vlaneseq
    %v76 = vshrl.u32 %v75, 7
    %v77 = vsub.s32 0, %v76
    %v78 = vrot.slane %v73, %v77
    %v96 = vunpack.c.l.b16 %v57
    %v97 = vunpack.c.l.b16 %v58
    %v98 = vunpack.c.l.b16 %v59
    %v99 = vunpack.c.l.b16 %v60
    %v100 = vunpack.c.l.b16 %v61
    %v101 = vunpack.c.l.b16 %v62
    %v102 = vunpack.c.l.b16 %v63
    %v103 = vunpack.c.l.b16 %v64
    %v104 = vunpack.c.l.b16 %v65
    %v105 = vunpack.c.l.b16 %v66
    %v106 = vunpack.c.l.b16 %v67
    %v107 = vunpack.c.l.b16 %v68
    %v108 = vunpack.c.l.b16 %v69
    %v109 = vunpack.c.l.b16 %v70
    %v110 = vunpack.c.l.b16 %v71
    %v111 = vunpack.c.l.b16 %v72
    %v112 = vpack.c.b16 %v97, %v96
    %v113 = vpack.c.b16 %v99, %v98
    %v114 = vpack.c.b16 %v101, %v100
    %v115 = vpack.c.b16 %v103, %v102
    %v116 = vpack.c.b16 %v105, %v104
    %v117 = vpack.c.b16 %v107, %v106
    %v118 = vpack.c.b16 %v109, %v108
    %v119 = vpack.c.b16 %v111, %v110
    %128 = vmatprep.subr.bf16.mxu0 0
    %129 = vmatpush1.bf16.msra.mxu0 %v112
    %130 = vmatprep.subr.bf16.mxu0 0
    %131 = vmatpush1.bf16.msra.mxu0 %v113
    %132 = vmatprep.subr.bf16.mxu0 0
    %133 = vmatpush1.bf16.msra.mxu0 %v114
    %134 = vmatprep.subr.bf16.mxu0 0
    %135 = vmatpush1.bf16.msra.mxu0 %v115
    %136 = vmatprep.subr.bf16.mxu0 0
    %137 = vmatpush1.bf16.msra.mxu0 %v116
    %138 = vmatprep.subr.bf16.mxu0 0
    %139 = vmatpush1.bf16.msra.mxu0 %v117
    %140 = vmatprep.subr.bf16.mxu0 0
    %141 = vmatpush1.bf16.msra.mxu0 %v118
    %142 = vmatprep.subr.bf16.mxu0 0
    %143 = vmatpush1.bf16.msra.mxu0 %v119
    %144 = vmatprep.subr.bf16.mxu0 0
    %145 = vmatpush1.bf16.msra.mxu0 0
    %146 = vmatprep.subr.bf16.mxu0 0
    %147 = vmatpush1.bf16.msra.mxu0 0
    %148 = vmatprep.subr.bf16.mxu0 0
    %149 = vmatpush1.bf16.msra.mxu0 0
    %150 = vmatprep.subr.bf16.mxu0 0
    %151 = vmatpush1.bf16.msra.mxu0 0
    %152 = vmatprep.subr.bf16.mxu0 0
    %153 = vmatpush1.bf16.msra.mxu0 0
    %154 = vmatprep.subr.bf16.mxu0 0
    %155 = vmatpush1.bf16.msra.mxu0 0
    %156 = vmatprep.subr.bf16.mxu0 0
    %157 = vmatpush1.bf16.msra.mxu0 0
    %158 = vmatprep.subr.bf16.mxu0 0
    %159 = vmatpush1.bf16.msra.mxu0 0
    %160 = vmatprep.mubr.bf16.mxu0 0
    %161 = vmatmul.mubr.bf16.gmra.mrb[0].mxu0 %v55
    %v162 = vpop.f32.mrb[0].mxu0
    %v163 = vadd.f32 %v78, %v162
    %v164 = vpop.f32.mrb[0].mxu0
    %v165 = vpop.f32.mrb[0].mxu0
    %v166 = vadd.f32 %v78, %v165
    %v167 = vpop.f32.mrb[0].mxu0
    %168 = vmatprep.mubr.bf16.mxu0 0
    %169 = vmatmul.mubr.bf16.gmra.mrb[0].mxu0 %v56
    %v170 = vpop.f32.mrb[0].mxu0
    %v171 = vadd.f32 %v78, %v170
    %v172 = vpop.f32.mrb[0].mxu0
    %v173 = vpop.f32.mrb[0].mxu0
    %v174 = vpop.f32.mrb[0].mxu0
    %175 = vdwg.mxu0
    %v176 = vmul.f32 %v52, %v163
    %v177 = vmul.f32 %v53, %v166
    %v178 = vmul.f32 %v54, %v171
    %v179 = vadd.f32 %v176, %v52
    %v180 = vadd.f32 %v177, %v53
    %v181 = vadd.f32 %v178, %v54
    %v182 = vpack.c.bf16 %v180, %v179
    %v183 = vpack.c.bf16 %v181, %v181
    %s184 = scalar_lea.vmem [#allocation2], 64
    %v185 = vld [vmem:[%s184] sm:$0xf]
    %v186 = vld [vmem:[%s184 + $0x4] sm:$0xf]
    %v187 = vld [vmem:[%s184 + $0x8] sm:$0xf]
    %v188 = vld [vmem:[%s184 + $0xc] sm:$0xf]
    %v189 = vld [vmem:[%s184 + $0x10] sm:$0xf]
    %v190 = vld [vmem:[%s184 + $0x14] sm:$0xf]
    %v191 = vld [vmem:[%s184 + $0x18] sm:$0xf]
    %v192 = vld [vmem:[%s184 + $0x1c] sm:$0xf]
    %v193 = vld [vmem:[%s184 + $0x20] sm:$0xf]
    %v194 = vld [vmem:[%s184 + $0x24] sm:$0xf]
    %v195 = vld [vmem:[%s184 + $0x28] sm:$0xf]
    %v196 = vld [vmem:[%s184 + $0x2c] sm:$0xf]
    %v197 = vld [vmem:[%s184 + $0x30] sm:$0xf]
    %v198 = vld [vmem:[%s184 + $0x34] sm:$0xf]
    %v199 = vld [vmem:[%s184 + $0x38] sm:$0xf]
    %v200 = vld [vmem:[%s184 + $0x3c] sm:$0xf]
    %s201 = scalar_lea.vmem %s3, 1
    %v202 = vld [vmem:[%s201] sm:$0x1]
    %v204 = vlaneseq
    %v205 = vshrl.u32 %v204, 7
    %v206 = vsub.s32 0, %v205
    %v207 = vrot.slane %v202, %v206
    %v225 = vunpack.c.l.b16 %v185
    %v226 = vunpack.c.l.b16 %v186
    %v227 = vunpack.c.l.b16 %v187
    %v228 = vunpack.c.l.b16 %v188
    %v229 = vunpack.c.l.b16 %v189
    %v230 = vunpack.c.l.b16 %v190
    %v231 = vunpack.c.l.b16 %v191
    %v232 = vunpack.c.l.b16 %v192
    %v233 = vunpack.c.l.b16 %v193
    %v234 = vunpack.c.l.b16 %v194
    %v235 = vunpack.c.l.b16 %v195
    %v236 = vunpack.c.l.b16 %v196
    %v237 = vunpack.c.l.b16 %v197
    %v238 = vunpack.c.l.b16 %v198
    %v239 = vunpack.c.l.b16 %v199
    %v240 = vunpack.c.l.b16 %v200
    %v241 = vpack.c.b16 %v226, %v225
    %v242 = vpack.c.b16 %v228, %v227
    %v243 = vpack.c.b16 %v230, %v229
    %v244 = vpack.c.b16 %v232, %v231
    %v245 = vpack.c.b16 %v234, %v233
    %v246 = vpack.c.b16 %v236, %v235
    %v247 = vpack.c.b16 %v238, %v237
    %v248 = vpack.c.b16 %v240, %v239
    %257 = vmatprep.subr.bf16.mxu0 0
    %258 = vmatpush1.bf16.msra.mxu0 %v241
    %259 = vmatprep.subr.bf16.mxu0 0
    %260 = vmatpush1.bf16.msra.mxu0 %v242
    %261 = vmatprep.subr.bf16.mxu0 0
    %262 = vmatpush1.bf16.msra.mxu0 %v243
    %263 = vmatprep.subr.bf16.mxu0 0
    %264 = vmatpush1.bf16.msra.mxu0 %v244
    %265 = vmatprep.subr.bf16.mxu0 0
    %266 = vmatpush1.bf16.msra.mxu0 %v245
    %267 = vmatprep.subr.bf16.mxu0 0
    %268 = vmatpush1.bf16.msra.mxu0 %v246
    %269 = vmatprep.subr.bf16.mxu0 0
    %270 = vmatpush1.bf16.msra.mxu0 %v247
    %271 = vmatprep.subr.bf16.mxu0 0
    %272 = vmatpush1.bf16.msra.mxu0 %v248
    %273 = vmatprep.subr.bf16.mxu0 0
    %274 = vmatpush1.bf16.msra.mxu0 0
    %275 = vmatprep.subr.bf16.mxu0 0
    %276 = vmatpush1.bf16.msra.mxu0 0
    %277 = vmatprep.subr.bf16.mxu0 0
    %278 = vmatpush1.bf16.msra.mxu0 0
    %279 = vmatprep.subr.bf16.mxu0 0
    %280 = vmatpush1.bf16.msra.mxu0 0
    %281 = vmatprep.subr.bf16.mxu0 0
    %282 = vmatpush1.bf16.msra.mxu0 0
    %283 = vmatprep.subr.bf16.mxu0 0
    %284 = vmatpush1.bf16.msra.mxu0 0
    %285 = vmatprep.subr.bf16.mxu0 0
    %286 = vmatpush1.bf16.msra.mxu0 0
    %287 = vmatprep.subr.bf16.mxu0 0
    %288 = vmatpush1.bf16.msra.mxu0 0
    %289 = vmatprep.mubr.bf16.mxu0 0
    %290 = vmatmul.mubr.bf16.gmra.mrb[0].mxu0 %v182
    %v291 = vpop.f32.mrb[0].mxu0
    %v292 = vadd.f32 %v207, %v291
    %v293 = vpop.f32.mrb[0].mxu0
    %v294 = vpop.f32.mrb[0].mxu0
    %v295 = vadd.f32 %v207, %v294
    %v296 = vpop.f32.mrb[0].mxu0
    %297 = vmatprep.mubr.bf16.mxu0 0
    %298 = vmatmul.mubr.bf16.gmra.mrb[0].mxu0 %v183
    %v299 = vpop.f32.mrb[0].mxu0
    %v300 = vadd.f32 %v207, %v299
    %v301 = vpop.f32.mrb[0].mxu0
    %v302 = vpop.f32.mrb[0].mxu0
    %v303 = vpop.f32.mrb[0].mxu0
    %304 = vdwg.mxu0
    %v305 = vmul.f32 %v52, %v292
    %v306 = vmul.f32 %v53, %v295
    %v307 = vmul.f32 %v54, %v300
    %v308 = vadd.f32 %v305, %v179
    %v309 = vadd.f32 %v306, %v180
    %v310 = vadd.f32 %v307, %v181
    %v311 = vpack.c.bf16 %v309, %v308
    %v312 = vpack.c.bf16 %v310, %v310
    %s313 = scalar_lea.vmem [#allocation2], 128
    %v314 = vld [vmem:[%s313] sm:$0xf]
    %v315 = vld [vmem:[%s313 + $0x4] sm:$0xf]
    %v316 = vld [vmem:[%s313 + $0x8] sm:$0xf]
    %v317 = vld [vmem:[%s313 + $0xc] sm:$0xf]
    %v318 = vld [vmem:[%s313 + $0x10] sm:$0xf]
    %v319 = vld [vmem:[%s313 + $0x14] sm:$0xf]
    %v320 = vld [vmem:[%s313 + $0x18] sm:$0xf]
    %v321 = vld [vmem:[%s313 + $0x1c] sm:$0xf]
    %v322 = vld [vmem:[%s313 + $0x20] sm:$0xf]
    %v323 = vld [vmem:[%s313 + $0x24] sm:$0xf]
    %v324 = vld [vmem:[%s313 + $0x28] sm:$0xf]
    %v325 = vld [vmem:[%s313 + $0x2c] sm:$0xf]
    %v326 = vld [vmem:[%s313 + $0x30] sm:$0xf]
    %v327 = vld [vmem:[%s313 + $0x34] sm:$0xf]
    %v328 = vld [vmem:[%s313 + $0x38] sm:$0xf]
    %v329 = vld [vmem:[%s313 + $0x3c] sm:$0xf]
    %s330 = scalar_lea.vmem %s3, 2
    %v331 = vld [vmem:[%s330] sm:$0x1]
    %v333 = vlaneseq
    %v334 = vshrl.u32 %v333, 7
    %v335 = vsub.s32 0, %v334
    %v336 = vrot.slane %v331, %v335
    %v354 = vunpack.c.l.b16 %v314
    %v355 = vunpack.c.l.b16 %v315
    %v356 = vunpack.c.l.b16 %v316
    %v357 = vunpack.c.l.b16 %v317
    %v358 = vunpack.c.l.b16 %v318
    %v359 = vunpack.c.l.b16 %v319
    %v360 = vunpack.c.l.b16 %v320
    %v361 = vunpack.c.l.b16 %v321
    %v362 = vunpack.c.l.b16 %v322
    %v363 = vunpack.c.l.b16 %v323
    %v364 = vunpack.c.l.b16 %v324
    %v365 = vunpack.c.l.b16 %v325
    %v366 = vunpack.c.l.b16 %v326
    %v367 = vunpack.c.l.b16 %v327
    %v368 = vunpack.c.l.b16 %v328
    %v369 = vunpack.c.l.b16 %v329
    %v370 = vpack.c.b16 %v355, %v354
    %v371 = vpack.c.b16 %v357, %v356
    %v372 = vpack.c.b16 %v359, %v358
    %v373 = vpack.c.b16 %v361, %v360
    %v374 = vpack.c.b16 %v363, %v362
    %v375 = vpack.c.b16 %v365, %v364
    %v376 = vpack.c.b16 %v367, %v366
    %v377 = vpack.c.b16 %v369, %v368
    %386 = vmatprep.subr.bf16.mxu0 0
    %387 = vmatpush1.bf16.msra.mxu0 %v370
    %388 = vmatprep.subr.bf16.mxu0 0
    %389 = vmatpush1.bf16.msra.mxu0 %v371
    %390 = vmatprep.subr.bf16.mxu0 0
    %391 = vmatpush1.bf16.msra.mxu0 %v372
    %392 = vmatprep.subr.bf16.mxu0 0
    %393 = vmatpush1.bf16.msra.mxu0 %v373
    %394 = vmatprep.subr.bf16.mxu0 0
    %395 = vmatpush1.bf16.msra.mxu0 %v374
    %396 = vmatprep.subr.bf16.mxu0 0
    %397 = vmatpush1.bf16.msra.mxu0 %v375
    %398 = vmatprep.subr.bf16.mxu0 0
    %399 = vmatpush1.bf16.msra.mxu0 %v376
    %400 = vmatprep.subr.bf16.mxu0 0
    %401 = vmatpush1.bf16.msra.mxu0 %v377
    %402 = vmatprep.subr.bf16.mxu0 0
    %403 = vmatpush1.bf16.msra.mxu0 0
    %404 = vmatprep.subr.bf16.mxu0 0
    %405 = vmatpush1.bf16.msra.mxu0 0
    %406 = vmatprep.subr.bf16.mxu0 0
    %407 = vmatpush1.bf16.msra.mxu0 0
    %408 = vmatprep.subr.bf16.mxu0 0
    %409 = vmatpush1.bf16.msra.mxu0 0
    %410 = vmatprep.subr.bf16.mxu0 0
    %411 = vmatpush1.bf16.msra.mxu0 0
    %412 = vmatprep.subr.bf16.mxu0 0
    %413 = vmatpush1.bf16.msra.mxu0 0
    %414 = vmatprep.subr.bf16.mxu0 0
    %415 = vmatpush1.bf16.msra.mxu0 0
    %416 = vmatprep.subr.bf16.mxu0 0
    %417 = vmatpush1.bf16.msra.mxu0 0
    %418 = vmatprep.mubr.bf16.mxu0 0
    %419 = vmatmul.mubr.bf16.gmra.mrb[0].mxu0 %v311
    %v420 = vpop.f32.mrb[0].mxu0
    %v421 = vadd.f32 %v336, %v420
    %v422 = vpop.f32.mrb[0].mxu0
    %v423 = vpop.f32.mrb[0].mxu0
    %v424 = vadd.f32 %v336, %v423
    %v425 = vpop.f32.mrb[0].mxu0
    %426 = vmatprep.mubr.bf16.mxu0 0
    %427 = vmatmul.mubr.bf16.gmra.mrb[0].mxu0 %v312
    %v428 = vpop.f32.mrb[0].mxu0
    %v429 = vadd.f32 %v336, %v428
    %v430 = vpop.f32.mrb[0].mxu0
    %v431 = vpop.f32.mrb[0].mxu0
    %v432 = vpop.f32.mrb[0].mxu0
    %433 = vdwg.mxu0
    %v434 = vmul.f32 %v52, %v421
    %v435 = vmul.f32 %v53, %v424
    %v436 = vmul.f32 %v54, %v429
    %v437 = vadd.f32 %v434, %v308
    %v438 = vadd.f32 %v435, %v309
    %v439 = vadd.f32 %v436, %v310
    %440 = vst [vmem:[#allocation5] sm:$0xff] %v437
    %441 = vst [vmem:[#allocation5 + $0x8] sm:$0xff] %v438
    %442 = vst [vmem:[#allocation5 + $0x10] sm:$0xff] %v439
    // Predicated region
    $region22: #{tpu_custom_call.1} parent=1 // pred_check
      _
    $region23: #{tpu_custom_call.1} parent=1 // pred_check_branch
      %444 = sbr.rel (0) target = $region25
    $region24: #{tpu_custom_call.1} parent=1 // pred_region
      %s446 = ssub.s32 384, 384
      %447 = vsyncadd [#allocation4], %s446
      %s448 = sshll.u32 [#allocation5], 4
      %s449 = int_to_ptr.vmem [resolvable:$true] %s448
      %454 = dma.vmem_to_hbm [thread:$0]  %s449, 384, %s4, [#allocation4], 128, 128, 8
    $region25: #{tpu_custom_call.1} parent=1 // pred_fallthru
      _
    // Predicated region
    $region26: #{tpu_custom_call.1} parent=1 // pred_check
      _
    $region27: #{tpu_custom_call.1} parent=1 // pred_check_branch
      %456 = sbr.rel (0) target = $region29
    $region28: #{tpu_custom_call.1} parent=1 // pred_region
      %457 = dma.done [#allocation4], 384
    $region29: #{tpu_custom_call.1} parent=1 // pred_fallthru
      _
    %458 = vsyncpa [#allocation3], 1
    %459 = vsyncpa [#allocation4], 1

</llo_original>
